<compile_context>
chip_gen: v6e
topology: v6e:2x2x1
jax: 0.10.0
libtpu: 0.0.40
codegen_flags: <defaults>
</compile_context>

<pallas_src>
import jax
import jax.numpy as jnp
from jax.experimental import pallas as pl
from jax.experimental.pallas import tpu as pltpu


def _round_up(x, m):
    return ((x + m - 1) // m) * m


def _link_pred_kernel(x1_ref, x2_ref, w1a_ref, w1b_ref, b1_ref,
                      w2_ref, b2_ref, w3_ref, b3_ref, o_ref):
    # concat(x1, x2) @ W1  ==  x1 @ W1[:n] + x2 @ W1[n:]  (avoids in-kernel concat)
    h1 = (jnp.dot(x1_ref[...], w1a_ref[...], preferred_element_type=jnp.float32)
          + jnp.dot(x2_ref[...], w1b_ref[...], preferred_element_type=jnp.float32)
          + b1_ref[...])
    h1 = jnp.maximum(h1, 0.0)
    # TODO(synk): dropout is a no-op in eval mode; training-mode dropout would use
    #             pltpu.prng_seed + pltpu.stateful_bernoulli here.

    h2 = jnp.dot(h1, w2_ref[...], preferred_element_type=jnp.float32) + b2_ref[...]
    h2 = jnp.maximum(h2, 0.0)

    logits = jnp.dot(h2, w3_ref[...], preferred_element_type=jnp.float32) + b3_ref[0]
    probs = jax.nn.sigmoid(logits)                          # (TILE_B, 1), batch on sublanes
    # Lane-dense store: transpose the tiny (TILE_B, 1) column to a (1, TILE_B) row
    # (XLU transpose; free slot in this HBM-bound kernel), then add a leading unit dim.
    o_ref[...] = jnp.transpose(probs)[None].astype(o_ref.dtype)   # (1, 1, TILE_B)


def link_prediction_forward(x1, x2, params, *, tile_b=None):
    """x1, x2: (B, n_representation) float32. Returns (B, 1) float32."""
    w1, b1, w2, b2, w3, b3 = params
    B, n_rep = x1.shape
    h0 = w1.shape[1]
    h1d = w2.shape[1]

    # Tile size: large enough to amortize per-step overhead, small enough for VMEM
    # on every generation (v5e 16 MiB default scoped, v7x 32 MiB default / 64 MiB phys).
    if tile_b is None:
        tile_b = min(8192, _round_up(max(B, 8), 8))
    tile_b = max(8, _round_up(tile_b, 8))

    b_pad = _round_up(B, tile_b)
    n_tiles = b_pad // tile_b
    if b_pad != B:
        pad = ((0, b_pad - B), (0, 0))
        x1 = jnp.pad(x1, pad)
        x2 = jnp.pad(x2, pad)

    # Split W1 into the part multiplying x1 and the part multiplying x2.
    w1a = w1[:n_rep]       # (n_rep, hidden0)
    w1b = w1[n_rep:]       # (n_rep, hidden0)

    # Weights/biases: constant block index -> VMEM-resident across all grid steps.
    const = lambda shape: pl.BlockSpec(shape, lambda i: tuple(0 for _ in shape))

    weight_bytes = 4 * (w1.size + w2.size + w3.size + b1.size + b2.size + b3.size)
    cost = pl.CostEstimate(
        flops=2 * b_pad * (2 * n_rep * h0 + h0 * h1d + h1d * 1),
        transcendentals=b_pad,                                   # sigmoid exp per row
        bytes_accessed=4 * (2 * b_pad * n_rep + b_pad) + weight_bytes,
    )

    out3 = pl.pallas_call(
        _link_pred_kernel,
        out_shape=jax.ShapeDtypeStruct((n_tiles, 1, tile_b), jnp.float32),
        grid=(n_tiles,),
        in_specs=[
            pl.BlockSpec((tile_b, n_rep), lambda i: (i, 0)),     # x1 batch tile
            pl.BlockSpec((tile_b, n_rep), lambda i: (i, 0)),     # x2 batch tile
            const(w1a.shape),                                    # W1[:n]
            const(w1b.shape),                                    # W1[n:]
            const((1, h0)),                                      # b1
            const(w2.shape),                                     # W2
            const((1, h1d)),                                     # b2
            const(w3.shape),                                     # W3
            pl.BlockSpec(memory_space=pltpu.MemorySpace.SMEM),   # b3 scalar in SMEM
        ],
        out_specs=pl.BlockSpec((1, 1, tile_b), lambda i: (i, 0, 0)),
        compiler_params=pltpu.CompilerParams(
            dimension_semantics=("parallel",)),
        cost_estimate=cost,
    )(x1, x2, w1a, w1b,
      b1.reshape(1, h0), w2, b2.reshape(1, h1d), w3, b3.reshape(1))

    # (n_tiles, 1, tile_b) row-major == padded batch order; drop padding rows.
    return out3.reshape(b_pad, 1)[:B]


def init_params(key, n_representation, hidden_dims=(128, 32)):
    """xavier_uniform weights (like torch.nn.init.xavier_uniform_), PyTorch-default
    uniform(-1/sqrt(fan_in), 1/sqrt(fan_in)) biases. Weights stored as (in, out)."""
    def xavier(key, fan_in, fan_out):
        limit = jnp.sqrt(6.0 / (fan_in + fan_out))
        return jax.random.uniform(key, (fan_in, fan_out), jnp.float32, -limit, limit)

    def bias(key, fan_in, fan_out):
        bound = 1.0 / jnp.sqrt(fan_in)
        return jax.random.uniform(key, (fan_out,), jnp.float32, -bound, bound)

    k = jax.random.split(key, 6)
    d_in = 2 * n_representation
    w1 = xavier(k[0], d_in, hidden_dims[0]);           b1 = bias(k[1], d_in, hidden_dims[0])
    w2 = xavier(k[2], hidden_dims[0], hidden_dims[1]); b2 = bias(k[3], hidden_dims[0], hidden_dims[1])
    w3 = xavier(k[4], hidden_dims[1], 1);              b3 = bias(k[5], hidden_dims[1], 1)
    return (w1, b1, w2, b2, w3, b3)


def reference_forward(x1, x2, params):
    w1, b1, w2, b2, w3, b3 = params
    x = jnp.concatenate([x1, x2], axis=1)
    x = jax.nn.relu(x @ w1 + b1)
    x = jax.nn.relu(x @ w2 + b2)
    return jax.nn.sigmoid(x @ w3 + b3)


if __name__ == "__main__":
    key = jax.random.PRNGKey(0)
    n_representation = 32
    kp, kx1, kx2, kx3, kx4 = jax.random.split(key, 5)
    params = init_params(kp, n_representation)

    # Small single-tile case (B == tile).
    batch = 8
    x1 = jax.random.normal(kx1, (batch, n_representation), jnp.float32)
    x2 = jax.random.normal(kx2, (batch, n_representation), jnp.float32)
    out = jax.block_until_ready(link_prediction_forward(x1, x2, params))
    ref = reference_forward(x1, x2, params)
    assert out.shape == (batch, 1)
    assert jnp.allclose(out, ref, atol=1e-5, rtol=1e-5), "mismatch vs reference (B=8)"

    # Multi-tile case exercising batch padding and the parallel grid axis.
    batch2 = 300
    y1 = jax.random.normal(kx3, (batch2, n_representation), jnp.float32)
    y2 = jax.random.normal(kx4, (batch2, n_representation), jnp.float32)
    out2 = jax.block_until_ready(link_prediction_forward(y1, y2, params, tile_b=64))
    ref2 = reference_forward(y1, y2, params)
    assert out2.shape == (batch2, 1)
    assert jnp.allclose(out2, ref2, atol=1e-5, rtol=1e-5), "mismatch vs reference (B=300)"

    print("KERNEL_OK")
</pallas_src>

<mosaic_0001>
module attributes {stable_mosaic.version = 11 : i64} {
  func.func @_link_pred_kernel(%arg0: i32, %arg1: memref<8x32xf32, #tpu.memory_space<vmem>>, %arg2: memref<8x32xf32, #tpu.memory_space<vmem>>, %arg3: memref<32x128xf32, #tpu.memory_space<vmem>>, %arg4: memref<32x128xf32, #tpu.memory_space<vmem>>, %arg5: memref<1x128xf32, #tpu.memory_space<vmem>>, %arg6: memref<128x32xf32, #tpu.memory_space<vmem>>, %arg7: memref<1x32xf32, #tpu.memory_space<vmem>>, %arg8: memref<32x1xf32, #tpu.memory_space<vmem>>, %arg9: memref<1xf32, #tpu.memory_space<smem>>, %arg10: memref<1x1x8xf32, #tpu.memory_space<vmem>>) attributes {dimension_semantics = [#tpu.dimension_semantics<parallel>], iteration_bounds = array<i64: 1>, scalar_prefetch = 0 : i64, scratch_operands = 0 : i64, tpu.core_type = #tpu.core_type<tc>, window_params = [{transform_indices = @transform_0, window_bounds = array<i64: 8, 32>}, {transform_indices = @transform_1, window_bounds = array<i64: 8, 32>}, {pipeline_mode = #tpu.pipeline_mode<synchronous>, transform_indices = @transform_2, window_bounds = array<i64: 32, 128>}, {pipeline_mode = #tpu.pipeline_mode<synchronous>, transform_indices = @transform_3, window_bounds = array<i64: 32, 128>}, {pipeline_mode = #tpu.pipeline_mode<synchronous>, transform_indices = @transform_4, window_bounds = array<i64: 1, 128>}, {pipeline_mode = #tpu.pipeline_mode<synchronous>, transform_indices = @transform_5, window_bounds = array<i64: 128, 32>}, {pipeline_mode = #tpu.pipeline_mode<synchronous>, transform_indices = @transform_6, window_bounds = array<i64: 1, 32>}, {pipeline_mode = #tpu.pipeline_mode<synchronous>, transform_indices = @transform_7, window_bounds = array<i64: 32, 1>}, {transform_indices = @transform_8, window_bounds = array<i64: 1>}, {transform_indices = @transform_9, window_bounds = array<i64: 1, 1, 8>}]} {
    %c0 = arith.constant 0 : index
    %c0_0 = arith.constant 0 : index
    %0 = vector.load %arg1[%c0, %c0_0] : memref<8x32xf32, #tpu.memory_space<vmem>>, vector<8x32xf32>
    %c0_1 = arith.constant 0 : index
    %c0_2 = arith.constant 0 : index
    %1 = vector.load %arg3[%c0_1, %c0_2] : memref<32x128xf32, #tpu.memory_space<vmem>>, vector<32x128xf32>
    %cst = arith.constant dense<0.000000e+00> : vector<8x128xf32>
    %2 = tpu.matmul %0, %1, %cst {dimension_numbers = #tpu.dot_dimension_numbers<[1], [0], [0], [1], [0, 0, 1, 1], [], []>} : vector<8x32xf32>, vector<32x128xf32>, vector<8x128xf32> -> vector<8x128xf32>
    %c0_3 = arith.constant 0 : index
    %c0_4 = arith.constant 0 : index
    %3 = vector.load %arg2[%c0_3, %c0_4] : memref<8x32xf32, #tpu.memory_space<vmem>>, vector<8x32xf32>
    %c0_5 = arith.constant 0 : index
    %c0_6 = arith.constant 0 : index
    %4 = vector.load %arg4[%c0_5, %c0_6] : memref<32x128xf32, #tpu.memory_space<vmem>>, vector<32x128xf32>
    %cst_7 = arith.constant dense<0.000000e+00> : vector<8x128xf32>
    %5 = tpu.matmul %3, %4, %cst_7 {dimension_numbers = #tpu.dot_dimension_numbers<[1], [0], [0], [1], [0, 0, 1, 1], [], []>} : vector<8x32xf32>, vector<32x128xf32>, vector<8x128xf32> -> vector<8x128xf32>
    %6 = arith.addf %2, %5 : vector<8x128xf32>
    %c0_8 = arith.constant 0 : index
    %c0_9 = arith.constant 0 : index
    %7 = vector.load %arg5[%c0_8, %c0_9] : memref<1x128xf32, #tpu.memory_space<vmem>>, vector<1x128xf32>
    %8 = vector.broadcast %7 : vector<1x128xf32> to vector<8x128xf32>
    %9 = arith.addf %6, %8 : vector<8x128xf32>
    %cst_10 = arith.constant 0.000000e+00 : f32
    %10 = vector.broadcast %cst_10 : f32 to vector<8x128xf32>
    %11 = arith.maximumf %9, %10 : vector<8x128xf32>
    %c0_11 = arith.constant 0 : index
    %c0_12 = arith.constant 0 : index
    %12 = vector.load %arg6[%c0_11, %c0_12] : memref<128x32xf32, #tpu.memory_space<vmem>>, vector<128x32xf32>
    %cst_13 = arith.constant dense<0.000000e+00> : vector<8x32xf32>
    %13 = tpu.matmul %11, %12, %cst_13 {dimension_numbers = #tpu.dot_dimension_numbers<[1], [0], [0], [1], [0, 0, 1, 1], [], []>} : vector<8x128xf32>, vector<128x32xf32>, vector<8x32xf32> -> vector<8x32xf32>
    %c0_14 = arith.constant 0 : index
    %c0_15 = arith.constant 0 : index
    %14 = vector.load %arg7[%c0_14, %c0_15] : memref<1x32xf32, #tpu.memory_space<vmem>>, vector<1x32xf32>
    %15 = vector.broadcast %14 : vector<1x32xf32> to vector<8x32xf32>
    %16 = arith.addf %13, %15 : vector<8x32xf32>
    %cst_16 = arith.constant 0.000000e+00 : f32
    %17 = vector.broadcast %cst_16 : f32 to vector<8x32xf32>
    %18 = arith.maximumf %16, %17 : vector<8x32xf32>
    %c0_17 = arith.constant 0 : index
    %c0_18 = arith.constant 0 : index
    %19 = vector.load %arg8[%c0_17, %c0_18] : memref<32x1xf32, #tpu.memory_space<vmem>>, vector<32x1xf32>
    %cst_19 = arith.constant dense<0.000000e+00> : vector<8x1xf32>
    %20 = tpu.matmul %18, %19, %cst_19 {dimension_numbers = #tpu.dot_dimension_numbers<[1], [0], [0], [1], [0, 0, 1, 1], [], []>} : vector<8x32xf32>, vector<32x1xf32>, vector<8x1xf32> -> vector<8x1xf32>
    %c0_20 = arith.constant 0 : index
    %21 = memref.load %arg9[%c0_20] : memref<1xf32, #tpu.memory_space<smem>>
    %22 = vector.broadcast %21 : f32 to vector<8x1xf32>
    %23 = arith.addf %20, %22 : vector<8x1xf32>
    %24 = arith.negf %23 : vector<8x1xf32>
    %25 = math.exp %24 : vector<8x1xf32>
    %cst_21 = arith.constant 1.000000e+00 : f32
    %26 = vector.broadcast %cst_21 : f32 to vector<8x1xf32>
    %27 = arith.addf %26, %25 : vector<8x1xf32>
    %28 = arith.divf %26, %27 : vector<8x1xf32>
    %29 = tpu.transpose %28, [1, 0] : vector<8x1xf32> -> vector<1x8xf32>
    %30 = vector.shape_cast %29 : vector<1x8xf32> to vector<1x1x8xf32>
    %c0_22 = arith.constant 0 : index
    %c0_23 = arith.constant 0 : index
    %c0_24 = arith.constant 0 : index
    %31 = vector.load %arg10[%c0_22, %c0_23, %c0_24] : memref<1x1x8xf32, #tpu.memory_space<vmem>>, vector<1x1x8xf32>
    tpu.vector_store %arg10[%c0_22, %c0_23, %c0_24], %30 {strides = array<i32>} : memref<1x1x8xf32, #tpu.memory_space<vmem>>, vector<1x1x8xf32>,
    return
  }
  func.func @transform_0(%arg0: i32) -> (i32, i32) {
    %c0_i32 = arith.constant 0 : i32
    %c0_i32_0 = arith.constant 0 : i32
    return %arg0, %c0_i32 : i32, i32
  }
  func.func @transform_1(%arg0: i32) -> (i32, i32) {
    %c0_i32 = arith.constant 0 : i32
    %c0_i32_0 = arith.constant 0 : i32
    return %arg0, %c0_i32 : i32, i32
  }
  func.func @transform_2(%arg0: i32) -> (i32, i32) {
    %c0_i32 = arith.constant 0 : i32
    %c0_i32_0 = arith.constant 0 : i32
    %c0_i32_1 = arith.constant 0 : i32
    return %c0_i32, %c0_i32_0 : i32, i32
  }
  func.func @transform_3(%arg0: i32) -> (i32, i32) {
    %c0_i32 = arith.constant 0 : i32
    %c0_i32_0 = arith.constant 0 : i32
    %c0_i32_1 = arith.constant 0 : i32
    return %c0_i32, %c0_i32_0 : i32, i32
  }
  func.func @transform_4(%arg0: i32) -> (i32, i32) {
    %c0_i32 = arith.constant 0 : i32
    %c0_i32_0 = arith.constant 0 : i32
    %c0_i32_1 = arith.constant 0 : i32
    return %c0_i32, %c0_i32_0 : i32, i32
  }
  func.func @transform_5(%arg0: i32) -> (i32, i32) {
    %c0_i32 = arith.constant 0 : i32
    %c0_i32_0 = arith.constant 0 : i32
    %c0_i32_1 = arith.constant 0 : i32
    return %c0_i32, %c0_i32_0 : i32, i32
  }
  func.func @transform_6(%arg0: i32) -> (i32, i32) {
    %c0_i32 = arith.constant 0 : i32
    %c0_i32_0 = arith.constant 0 : i32
    %c0_i32_1 = arith.constant 0 : i32
    return %c0_i32, %c0_i32_0 : i32, i32
  }
  func.func @transform_7(%arg0: i32) -> (i32, i32) {
    %c0_i32 = arith.constant 0 : i32
    %c0_i32_0 = arith.constant 0 : i32
    %c0_i32_1 = arith.constant 0 : i32
    return %c0_i32, %c0_i32_0 : i32, i32
  }
  func.func @transform_8(%arg0: i32) -> i32 {
    %c0_i32 = arith.constant 0 : i32
    %c0_i32_0 = arith.constant 0 : i32
    return %c0_i32 : i32
  }
  func.func @transform_9(%arg0: i32) -> (i32, i32, i32) {
    %c0_i32 = arith.constant 0 : i32
    %c0_i32_0 = arith.constant 0 : i32
    %c0_i32_1 = arith.constant 0 : i32
    return %arg0, %c0_i32, %c0_i32_0 : i32, i32, i32
  }
}

</mosaic_0001>

<llo_original>
// kernel: tpu_custom_call.1
$region0: #{tpu_custom_call.1}
  #allocation0 [shape = 'u32[]', space=smem, size = 0x4, offset = 0x4, fixed_abs, tag = 'smem constant byte address 0x4 - core index']
  #allocation1 [shape = 'u32[144,128]{1,0:T(1,128)}', space=vmem, size = 0x12000, scoped, tag = 'internal scratch']
  #allocation2 [shape = 'f32[1]{0:T(128)S(6)}', space=smem, size = 0x200, scoped, tag = 'scoped memory for tpu_custom_call.1']
  %s0 = inlined_call_operand.vmem [shape: f32[8,32], index: 0, kind: input, shape index: {}]
  %s1 = inlined_call_operand.vmem [shape: f32[8,32], index: 1, kind: input, shape index: {}]
  %s2 = inlined_call_operand.vmem [shape: f32[32,128], index: 2, kind: input, shape index: {}]
  %s3 = inlined_call_operand.vmem [shape: f32[32,128], index: 3, kind: input, shape index: {}]
  %s4 = inlined_call_operand.vmem [shape: f32[1,128], index: 4, kind: input, shape index: {}]
  %s5 = inlined_call_operand.vmem [shape: f32[128,32], index: 5, kind: input, shape index: {}]
  %s6 = inlined_call_operand.vmem [shape: f32[1,32], index: 6, kind: input, shape index: {}]
  %s7 = inlined_call_operand.vmem [shape: f32[32,1], index: 7, kind: input, shape index: {}]
  %s8 = inlined_call_operand.<no memory space> [shape: f32[1], index: 8, kind: input, shape index: {}]
  %s9 = inlined_call_operand.hbm [shape: f32[1,1,8], index: 9, kind: output, shape index: {}]
  %s10 = sld [smem:[#allocation0]]
  $region46: #{tpu_custom_call.1} parent=0
    _
  %s12 = ssub.s32 1, %s10
  %s13 = scalar_select 0, %s12, %s10
  %14 = sst [smem:[#allocation2]] %s8
  $region1: #{tpu_custom_call.1} parent=0
    #allocation3 [shape = 'u8[512]{0}', space=vmem, size = 0x400, scoped, tag = 'output window, operand 0, single buffered']
    #allocation4 [shape = 's32[1]{0}', space=sflag, size = 0x4, scoped, tag = 'scoped memory for tpu_custom_call.1']
    %15 = vsyncpa [#allocation4], 0
    // Predicated region
    $region2: #{tpu_custom_call.1} parent=1 // pred_check
      _
    $region3: #{tpu_custom_call.1} parent=1 // pred_check_branch
      %17 = sbr.rel (0) target = $region5
    $region4: #{tpu_custom_call.1} parent=1 // pred_region
      _
    $region5: #{tpu_custom_call.1} parent=1 // pred_fallthru
      _
    // Predicated region
    $region6: #{tpu_custom_call.1} parent=1 // pred_check
      _
    $region7: #{tpu_custom_call.1} parent=1 // pred_check_branch
      %19 = sbr.rel (0) target = $region9
    $region8: #{tpu_custom_call.1} parent=1 // pred_region
      _
    $region9: #{tpu_custom_call.1} parent=1 // pred_fallthru
      _
    // Predicated region
    $region10: #{tpu_custom_call.1} parent=1 // pred_check
      _
    $region11: #{tpu_custom_call.1} parent=1 // pred_check_branch
      %21 = sbr.rel (0) target = $region13
    $region12: #{tpu_custom_call.1} parent=1 // pred_region
      _
    $region13: #{tpu_custom_call.1} parent=1 // pred_fallthru
      _
    // Predicated region
    $region14: #{tpu_custom_call.1} parent=1 // pred_check
      _
    $region15: #{tpu_custom_call.1} parent=1 // pred_check_branch
      %23 = sbr.rel (0) target = $region17
    $region16: #{tpu_custom_call.1} parent=1 // pred_region
      _
    $region17: #{tpu_custom_call.1} parent=1 // pred_fallthru
      _
    // Predicated region
    $region18: #{tpu_custom_call.1} parent=1 // pred_check
      _
    $region19: #{tpu_custom_call.1} parent=1 // pred_check_branch
      %25 = sbr.rel (0) target = $region21
    $region20: #{tpu_custom_call.1} parent=1 // pred_region
      _
    $region21: #{tpu_custom_call.1} parent=1 // pred_fallthru
      _
    // Predicated region
    $region22: #{tpu_custom_call.1} parent=1 // pred_check
      _
    $region23: #{tpu_custom_call.1} parent=1 // pred_check_branch
      %27 = sbr.rel (0) target = $region25
    $region24: #{tpu_custom_call.1} parent=1 // pred_region
      _
    $region25: #{tpu_custom_call.1} parent=1 // pred_fallthru
      _
    // Predicated region
    $region26: #{tpu_custom_call.1} parent=1 // pred_check
      _
    $region27: #{tpu_custom_call.1} parent=1 // pred_check_branch
      %29 = sbr.rel (0) target = $region29
    $region28: #{tpu_custom_call.1} parent=1 // pred_region
      _
    $region29: #{tpu_custom_call.1} parent=1 // pred_fallthru
      _
    // Predicated region
    $region30: #{tpu_custom_call.1} parent=1 // pred_check
      _
    $region31: #{tpu_custom_call.1} parent=1 // pred_check_branch
      %31 = sbr.rel (0) target = $region33
    $region32: #{tpu_custom_call.1} parent=1 // pred_region
      _
    $region33: #{tpu_custom_call.1} parent=1 // pred_fallthru
      _
    // Predicated region
    $region34: #{tpu_custom_call.1} parent=1 // pred_check
      _
    $region35: #{tpu_custom_call.1} parent=1 // pred_check_branch
      %33 = sbr.rel (0) target = $region37
    $region36: #{tpu_custom_call.1} parent=1 // pred_region
      _
    $region37: #{tpu_custom_call.1} parent=1 // pred_fallthru
      _
    %v34 = vld [vmem:[%s0] sm:$0xff]
    %v35 = vld [vmem:[%s2] sm:$0xff]
    %v36 = vld [vmem:[%s2 + $0x8] sm:$0xff]
    %v37 = vld [vmem:[%s2 + $0x10] sm:$0xff]
    %v38 = vld [vmem:[%s2 + $0x18] sm:$0xff]
    %v39 = vld [vmem:[%s1] sm:$0xff]
    %v40 = vld [vmem:[%s3] sm:$0xff]
    %v41 = vld [vmem:[%s3 + $0x8] sm:$0xff]
    %v42 = vld [vmem:[%s3 + $0x10] sm:$0xff]
    %v43 = vld [vmem:[%s3 + $0x18] sm:$0xff]
    %vm44 = vcmask 261120
    %v46 = vsel %vm44, %v39, 0
    %48 = vmatprep.subr.mxu0 0.0
    %49 = vmatpush1.msra.mxu0 0.0
    %50 = vmatprep.subr.mxu0 0.0
    %51 = vmatpush1.msra.mxu0 0.0
    %52 = vmatprep.subr.mxu0 0.0
    %53 = vmatpush1.msra.mxu0 0.0
    %54 = vmatprep.subr.mxu0 0.0
    %55 = vmatpush1.msra.mxu0 0.0
    %56 = vmatprep.subr.mxu0 0.0
    %57 = vmatpush1.msra.mxu0 0.0
    %58 = vmatprep.subr.mxu0 0.0
    %59 = vmatpush1.msra.mxu0 0.0
    %60 = vmatprep.subr.mxu0 0.0
    %61 = vmatpush1.msra.mxu0 0.0
    %62 = vmatprep.subr.mxu0 0.0
    %63 = vmatpush1.msra.mxu0 0.0
    %64 = vmatprep.subr.mxu0 0.0
    %65 = vmatpush1.msra.mxu0 0.0
    %66 = vmatprep.subr.mxu0 0.0
    %67 = vmatpush1.msra.mxu0 0.0
    %68 = vmatprep.subr.mxu0 0.0
    %69 = vmatpush1.msra.mxu0 0.0
    %70 = vmatprep.subr.mxu0 0.0
    %71 = vmatpush1.msra.mxu0 0.0
    %72 = vmatprep.subr.mxu0 0.0
    %73 = vmatpush1.msra.mxu0 %v43
    %74 = vmatprep.subr.mxu0 0.0
    %75 = vmatpush1.msra.mxu0 %v42
    %76 = vmatprep.subr.mxu0 0.0
    %77 = vmatpush1.msra.mxu0 %v41
    %78 = vmatprep.subr.mxu0 0.0
    %79 = vmatpush1.msra.mxu0 %v40
    %80 = vmatprep.subr.mxu0 0.0
    %81 = vmatpush2.msra.mxu0 0.0
    %82 = vmatprep.subr.mxu0 0.0
    %83 = vmatpush2.msra.mxu0 0.0
    %84 = vmatprep.subr.mxu0 0.0
    %85 = vmatpush2.msra.mxu0 0.0
    %86 = vmatprep.subr.mxu0 0.0
    %87 = vmatpush2.msra.mxu0 0.0
    %88 = vmatprep.subr.mxu0 0.0
    %89 = vmatpush2.msra.mxu0 0.0
    %90 = vmatprep.subr.mxu0 0.0
    %91 = vmatpush2.msra.mxu0 0.0
    %92 = vmatprep.subr.mxu0 0.0
    %93 = vmatpush2.msra.mxu0 0.0
    %94 = vmatprep.subr.mxu0 0.0
    %95 = vmatpush2.msra.mxu0 0.0
    %96 = vmatprep.subr.mxu0 0.0
    %97 = vmatpush2.msra.mxu0 0.0
    %98 = vmatprep.subr.mxu0 0.0
    %99 = vmatpush2.msra.mxu0 0.0
    %100 = vmatprep.subr.mxu0 0.0
    %101 = vmatpush2.msra.mxu0 0.0
    %102 = vmatprep.subr.mxu0 0.0
    %103 = vmatpush2.msra.mxu0 0.0
    %104 = vmatprep.subr.mxu0 0.0
    %105 = vmatpush2.msra.mxu0 0.0
    %106 = vmatprep.subr.mxu0 0.0
    %107 = vmatpush2.msra.mxu0 0.0
    %108 = vmatprep.subr.mxu0 0.0
    %109 = vmatpush2.msra.mxu0 0.0
    %110 = vmatprep.subr.mxu0 0.0
    %111 = vmatpush2.msra.mxu0 0.0
    %112 = vmatprep.mubr.f32.mxu0 0.0
    %113 = vmatmul.mubr.f32.gmra.mxu0 %v46
    %v114 = vpop.f32.mrf.mxu0
    %v115 = vadd.f32 0.0, %v114
    %v116 = vpop.f32.mrf.mxu0
    %117 = vdwg.mxu0
    %v119 = vsel %vm44, %v34, 0
    %121 = vmatprep.subr.mxu0 0.0
    %122 = vmatpush1.msra.mxu0 0.0
    %123 = vmatprep.subr.mxu0 0.0
    %124 = vmatpush1.msra.mxu0 0.0
    %125 = vmatprep.subr.mxu0 0.0
    %126 = vmatpush1.msra.mxu0 0.0
    %127 = vmatprep.subr.mxu0 0.0
    %128 = vmatpush1.msra.mxu0 0.0
    %129 = vmatprep.subr.mxu0 0.0
    %130 = vmatpush1.msra.mxu0 0.0
    %131 = vmatprep.subr.mxu0 0.0
    %132 = vmatpush1.msra.mxu0 0.0
    %133 = vmatprep.subr.mxu0 0.0
    %134 = vmatpush1.msra.mxu0 0.0
    %135 = vmatprep.subr.mxu0 0.0
    %136 = vmatpush1.msra.mxu0 0.0
    %137 = vmatprep.subr.mxu0 0.0
    %138 = vmatpush1.msra.mxu0 0.0
    %139 = vmatprep.subr.mxu0 0.0
    %140 = vmatpush1.msra.mxu0 0.0
    %141 = vmatprep.subr.mxu0 0.0
    %142 = vmatpush1.msra.mxu0 0.0
    %143 = vmatprep.subr.mxu0 0.0
    %144 = vmatpush1.msra.mxu0 0.0
    %145 = vmatprep.subr.mxu0 0.0
    %146 = vmatpush1.msra.mxu0 %v38
    %147 = vmatprep.subr.mxu0 0.0
    %148 = vmatpush1.msra.mxu0 %v37
    %149 = vmatprep.subr.mxu0 0.0
    %150 = vmatpush1.msra.mxu0 %v36
    %151 = vmatprep.subr.mxu0 0.0
    %152 = vmatpush1.msra.mxu0 %v35
    %153 = vmatprep.subr.mxu0 0.0
    %154 = vmatpush2.msra.mxu0 0.0
    %155 = vmatprep.subr.mxu0 0.0
    %156 = vmatpush2.msra.mxu0 0.0
    %157 = vmatprep.subr.mxu0 0.0
    %158 = vmatpush2.msra.mxu0 0.0
    %159 = vmatprep.subr.mxu0 0.0
    %160 = vmatpush2.msra.mxu0 0.0
    %161 = vmatprep.subr.mxu0 0.0
    %162 = vmatpush2.msra.mxu0 0.0
    %163 = vmatprep.subr.mxu0 0.0
    %164 = vmatpush2.msra.mxu0 0.0
    %165 = vmatprep.subr.mxu0 0.0
    %166 = vmatpush2.msra.mxu0 0.0
    %167 = vmatprep.subr.mxu0 0.0
    %168 = vmatpush2.msra.mxu0 0.0
    %169 = vmatprep.subr.mxu0 0.0
    %170 = vmatpush2.msra.mxu0 0.0
    %171 = vmatprep.subr.mxu0 0.0
    %172 = vmatpush2.msra.mxu0 0.0
    %173 = vmatprep.subr.mxu0 0.0
    %174 = vmatpush2.msra.mxu0 0.0
    %175 = vmatprep.subr.mxu0 0.0
    %176 = vmatpush2.msra.mxu0 0.0
    %177 = vmatprep.subr.mxu0 0.0
    %178 = vmatpush2.msra.mxu0 0.0
    %179 = vmatprep.subr.mxu0 0.0
    %180 = vmatpush2.msra.mxu0 0.0
    %181 = vmatprep.subr.mxu0 0.0
    %182 = vmatpush2.msra.mxu0 0.0
    %183 = vmatprep.subr.mxu0 0.0
    %184 = vmatpush2.msra.mxu0 0.0
    %185 = vmatprep.mubr.f32.mxu0 0.0
    %186 = vmatmul.mubr.f32.gmra.mxu0 %v119
    %v187 = vpop.f32.mrf.mxu0
    %v188 = vadd.f32 %v115, %v187
    %v189 = vpop.f32.mrf.mxu0
    %190 = vdwg.mxu0
    %v191 = vld [vmem:[%s4] sm:$0x1]
    %v193 = vlaneseq
    %v194 = vshrl.u32 %v193, 7
    %v195 = vsub.s32 0, %v194
    %v196 = vrot.slane %v191, %v195
    %v198 = vadd.f32 %v188, %v196
    %v199 = vmax.f32 %v198, 0.0
    %v200 = vld [vmem:[%s5] sm:$0xff]
    %v201 = vld [vmem:[%s5 + $0x8] sm:$0xff]
    %v202 = vld [vmem:[%s5 + $0x10] sm:$0xff]
    %v203 = vld [vmem:[%s5 + $0x18] sm:$0xff]
    %v204 = vld [vmem:[%s5 + $0x20] sm:$0xff]
    %v205 = vld [vmem:[%s5 + $0x28] sm:$0xff]
    %v206 = vld [vmem:[%s5 + $0x30] sm:$0xff]
    %v207 = vld [vmem:[%s5 + $0x38] sm:$0xff]
    %v208 = vld [vmem:[%s5 + $0x40] sm:$0xff]
    %v209 = vld [vmem:[%s5 + $0x48] sm:$0xff]
    %v210 = vld [vmem:[%s5 + $0x50] sm:$0xff]
    %v211 = vld [vmem:[%s5 + $0x58] sm:$0xff]
    %v212 = vld [vmem:[%s5 + $0x60] sm:$0xff]
    %v213 = vld [vmem:[%s5 + $0x68] sm:$0xff]
    %v214 = vld [vmem:[%s5 + $0x70] sm:$0xff]
    %v215 = vld [vmem:[%s5 + $0x78] sm:$0xff]
    %v216 = vld [vmem:[%s6] sm:$0x1]
    %v218 = vlaneseq
    %v219 = vshrl.u32 %v218, 7
    %v220 = vsub.s32 0, %v219
    %v221 = vrot.slane %v216, %v220
    %223 = vmatprep.subr.mxu0 0.0
    %224 = vmatpush1.msra.mxu0 %v215
    %225 = vmatprep.subr.mxu0 0.0
    %226 = vmatpush1.msra.mxu0 %v214
    %227 = vmatprep.subr.mxu0 0.0
    %228 = vmatpush1.msra.mxu0 %v213
    %229 = vmatprep.subr.mxu0 0.0
    %230 = vmatpush1.msra.mxu0 %v212
    %231 = vmatprep.subr.mxu0 0.0
    %232 = vmatpush1.msra.mxu0 %v211
    %233 = vmatprep.subr.mxu0 0.0
    %234 = vmatpush1.msra.mxu0 %v210
    %235 = vmatprep.subr.mxu0 0.0
    %236 = vmatpush1.msra.mxu0 %v209
    %237 = vmatprep.subr.mxu0 0.0
    %238 = vmatpush1.msra.mxu0 %v208
    %239 = vmatprep.subr.mxu0 0.0
    %240 = vmatpush1.msra.mxu0 %v207
    %241 = vmatprep.subr.mxu0 0.0
    %242 = vmatpush1.msra.mxu0 %v206
    %243 = vmatprep.subr.mxu0 0.0
    %244 = vmatpush1.msra.mxu0 %v205
    %245 = vmatprep.subr.mxu0 0.0
    %246 = vmatpush1.msra.mxu0 %v204
    %247 = vmatprep.subr.mxu0 0.0
    %248 = vmatpush1.msra.mxu0 %v203
    %249 = vmatprep.subr.mxu0 0.0
    %250 = vmatpush1.msra.mxu0 %v202
    %251 = vmatprep.subr.mxu0 0.0
    %252 = vmatpush1.msra.mxu0 %v201
    %253 = vmatprep.subr.mxu0 0.0
    %254 = vmatpush1.msra.mxu0 %v200
    %255 = vmatprep.subr.mxu0 0.0
    %256 = vmatpush2.msra.mxu0 0.0
    %257 = vmatprep.subr.mxu0 0.0
    %258 = vmatpush2.msra.mxu0 0.0
    %259 = vmatprep.subr.mxu0 0.0
    %260 = vmatpush2.msra.mxu0 0.0
    %261 = vmatprep.subr.mxu0 0.0
    %262 = vmatpush2.msra.mxu0 0.0
    %263 = vmatprep.subr.mxu0 0.0
    %264 = vmatpush2.msra.mxu0 0.0
    %265 = vmatprep.subr.mxu0 0.0
    %266 = vmatpush2.msra.mxu0 0.0
    %267 = vmatprep.subr.mxu0 0.0
    %268 = vmatpush2.msra.mxu0 0.0
    %269 = vmatprep.subr.mxu0 0.0
    %270 = vmatpush2.msra.mxu0 0.0
    %271 = vmatprep.subr.mxu0 0.0
    %272 = vmatpush2.msra.mxu0 0.0
    %273 = vmatprep.subr.mxu0 0.0
    %274 = vmatpush2.msra.mxu0 0.0
    %275 = vmatprep.subr.mxu0 0.0
    %276 = vmatpush2.msra.mxu0 0.0
    %277 = vmatprep.subr.mxu0 0.0
    %278 = vmatpush2.msra.mxu0 0.0
    %279 = vmatprep.subr.mxu0 0.0
    %280 = vmatpush2.msra.mxu0 0.0
    %281 = vmatprep.subr.mxu0 0.0
    %282 = vmatpush2.msra.mxu0 0.0
    %283 = vmatprep.subr.mxu0 0.0
    %284 = vmatpush2.msra.mxu0 0.0
    %285 = vmatprep.subr.mxu0 0.0
    %286 = vmatpush2.msra.mxu0 0.0
    %287 = vmatprep.mubr.f32.mxu0 0.0
    %288 = vmatmul.mubr.f32.gmra.mxu0 %v199
    %v289 = vpop.f32.mrf.mxu0
    %v290 = vadd.f32 %v221, %v289
    %v291 = vpop.f32.mrf.mxu0
    %292 = vdwg.mxu0
    %v293 = vmax.f32 %v290, 0.0
    %v294 = vld [vmem:[%s7] sm:$0xff]
    %v295 = vld [vmem:[%s7 + $0x8] sm:$0xff]
    %v296 = vld [vmem:[%s7 + $0x10] sm:$0xff]
    %v297 = vld [vmem:[%s7 + $0x18] sm:$0xff]
    %s298 = sld [smem:[#allocation2]]
    %v299 = vstv %s298
    %v301 = vsel %vm44, %v293, 0
    %303 = vmatprep.subr.mxu0 0.0
    %304 = vmatpush1.msra.mxu0 0.0
    %305 = vmatprep.subr.mxu0 0.0
    %306 = vmatpush1.msra.mxu0 0.0
    %307 = vmatprep.subr.mxu0 0.0
    %308 = vmatpush1.msra.mxu0 0.0
    %309 = vmatprep.subr.mxu0 0.0
    %310 = vmatpush1.msra.mxu0 0.0
    %311 = vmatprep.subr.mxu0 0.0
    %312 = vmatpush1.msra.mxu0 0.0
    %313 = vmatprep.subr.mxu0 0.0
    %314 = vmatpush1.msra.mxu0 0.0
    %315 = vmatprep.subr.mxu0 0.0
    %316 = vmatpush1.msra.mxu0 0.0
    %317 = vmatprep.subr.mxu0 0.0
    %318 = vmatpush1.msra.mxu0 0.0
    %319 = vmatprep.subr.mxu0 0.0
    %320 = vmatpush1.msra.mxu0 0.0
    %321 = vmatprep.subr.mxu0 0.0
    %322 = vmatpush1.msra.mxu0 0.0
    %323 = vmatprep.subr.mxu0 0.0
    %324 = vmatpush1.msra.mxu0 0.0
    %325 = vmatprep.subr.mxu0 0.0
    %326 = vmatpush1.msra.mxu0 0.0
    %327 = vmatprep.subr.mxu0 0.0
    %328 = vmatpush1.msra.mxu0 %v297
    %329 = vmatprep.subr.mxu0 0.0
    %330 = vmatpush1.msra.mxu0 %v296
    %331 = vmatprep.subr.mxu0 0.0
    %332 = vmatpush1.msra.mxu0 %v295
    %333 = vmatprep.subr.mxu0 0.0
    %334 = vmatpush1.msra.mxu0 %v294
    %335 = vmatprep.subr.mxu0 0.0
    %336 = vmatpush2.msra.mxu0 0.0
    %337 = vmatprep.subr.mxu0 0.0
    %338 = vmatpush2.msra.mxu0 0.0
    %339 = vmatprep.subr.mxu0 0.0
    %340 = vmatpush2.msra.mxu0 0.0
    %341 = vmatprep.subr.mxu0 0.0
    %342 = vmatpush2.msra.mxu0 0.0
    %343 = vmatprep.subr.mxu0 0.0
    %344 = vmatpush2.msra.mxu0 0.0
    %345 = vmatprep.subr.mxu0 0.0
    %346 = vmatpush2.msra.mxu0 0.0
    %347 = vmatprep.subr.mxu0 0.0
    %348 = vmatpush2.msra.mxu0 0.0
    %349 = vmatprep.subr.mxu0 0.0
    %350 = vmatpush2.msra.mxu0 0.0
    %351 = vmatprep.subr.mxu0 0.0
    %352 = vmatpush2.msra.mxu0 0.0
    %353 = vmatprep.subr.mxu0 0.0
    %354 = vmatpush2.msra.mxu0 0.0
    %355 = vmatprep.subr.mxu0 0.0
    %356 = vmatpush2.msra.mxu0 0.0
    %357 = vmatprep.subr.mxu0 0.0
    %358 = vmatpush2.msra.mxu0 0.0
    %359 = vmatprep.subr.mxu0 0.0
    %360 = vmatpush2.msra.mxu0 0.0
    %361 = vmatprep.subr.mxu0 0.0
    %362 = vmatpush2.msra.mxu0 0.0
    %363 = vmatprep.subr.mxu0 0.0
    %364 = vmatpush2.msra.mxu0 0.0
    %365 = vmatprep.subr.mxu0 0.0
    %366 = vmatpush2.msra.mxu0 0.0
    %367 = vmatprep.mubr.f32.mxu0 0.0
    %368 = vmatmul.mubr.f32.gmra.mxu0 %v301
    %v369 = vpop.f32.mrf.mxu0
    %v370 = vadd.f32 %v299, %v369
    %v371 = vpop.f32.mrf.mxu0
    %372 = vdwg.mxu0
    %v373 = vxor.u32 %v370, 2147483648
    %v374 = vmul.f32 %v373, 1.442695
    %v375 = vpow.pop %v374
    %v376 = vadd.f32 %v375, 1.0
    %v377 = vrcp.pop %v376
    %v378 = vmul.f32 1.0, %v377
    %379 = vxpose.xlu0.b32.start [1/16] %v378, 128
    %380 = vxpose.xlu0.b32.cont [2/16] 0.0, 128
    %381 = vxpose.xlu0.b32.cont [3/16] 0.0, 128
    %382 = vxpose.xlu0.b32.cont [4/16] 0.0, 128
    %383 = vxpose.xlu0.b32.cont [5/16] 0.0, 128
    %384 = vxpose.xlu0.b32.cont [6/16] 0.0, 128
    %385 = vxpose.xlu0.b32.cont [7/16] 0.0, 128
    %386 = vxpose.xlu0.b32.cont [8/16] 0.0, 128
    %387 = vxpose.xlu0.b32.cont [9/16] 0.0, 128
    %388 = vxpose.xlu0.b32.cont [10/16] 0.0, 128
    %389 = vxpose.xlu0.b32.cont [11/16] 0.0, 128
    %390 = vxpose.xlu0.b32.cont [12/16] 0.0, 128
    %391 = vxpose.xlu0.b32.cont [13/16] 0.0, 128
    %392 = vxpose.xlu0.b32.cont [14/16] 0.0, 128
    %393 = vxpose.xlu0.b32.cont [15/16] 0.0, 128
    %394 = vxpose.xlu0.b32.end [16/16] 0.0, 128
    %v395 = vpop.trf.xlu0
    %v396 = vpop.trf.xlu0
    %v397 = vpop.trf.xlu0
    %v398 = vpop.trf.xlu0
    %v399 = vpop.trf.xlu0
    %v400 = vpop.trf.xlu0
    %v401 = vpop.trf.xlu0
    %v402 = vpop.trf.xlu0
    %v403 = vpop.trf.xlu0
    %v404 = vpop.trf.xlu0
    %v405 = vpop.trf.xlu0
    %v406 = vpop.trf.xlu0
    %v407 = vpop.trf.xlu0
    %v408 = vpop.trf.xlu0
    %v409 = vpop.trf.xlu0
    %v410 = vpop.trf.xlu0
    %vm411 = vcmask 57344
    %412 = vst.msk [vmem:[#allocation3] sm:$0x1] %vm411, %v395
    // Predicated region
    $region38: #{tpu_custom_call.1} parent=1 // pred_check
      _
    $region39: #{tpu_custom_call.1} parent=1 // pred_check_branch
      %414 = sbr.rel (0) target = $region41
    $region40: #{tpu_custom_call.1} parent=1 // pred_region
      %s416 = ssub.s32 16, 16
      %417 = vsyncadd [#allocation4], %s416
      %s419 = sshll.u32 [#allocation3], 4
      %s420 = int_to_ptr.vmem [resolvable:$true] %s419
      %422 = dma.vmem_to_hbm [thread:$0]  %s420, 16, %s9, [#allocation4]
    $region41: #{tpu_custom_call.1} parent=1 // pred_fallthru
      _
    // Predicated region
    $region42: #{tpu_custom_call.1} parent=1 // pred_check
      _
    $region43: #{tpu_custom_call.1} parent=1 // pred_check_branch
      %424 = sbr.rel (0) target = $region45
    $region44: #{tpu_custom_call.1} parent=1 // pred_region
      %425 = dma.done [#allocation4], 16
    $region45: #{tpu_custom_call.1} parent=1 // pred_fallthru
      _
    %426 = vsyncpa [#allocation4], 1

</llo_original>
